<compile_context>
chip_gen: v7x
topology: tpu7x:2x2x1
jax: 0.10.0
libtpu: 0.0.40
codegen_flags: <defaults>
</compile_context>

<pallas_src>
import functools

import jax
import jax.numpy as jnp
from jax.experimental import pallas as pl
from jax.experimental.pallas import tpu as pltpu


def _round_up(x: int, m: int) -> int:
    return (x + m - 1) // m * m


def _fused_kernel(x_ref, w_ref, b_ref, o_ref):
    """Fused patch-sum (VPU) + projection (MXU) + mean pool for one grid step.

    x_ref : (TM, C*h, p*W)  free NCHW view of an image tile;
                            row index = c*h + hi, lane index q = p1*W + wi*p + p2
    w_ref : (C, p*W, TN)    projection weight re-laid to (c, q, d), expanded over
                            wi and pre-scaled by 1/N (VMEM resident across grid)
    b_ref : (1, TN)         bias slice
    o_ref : (TM, TN)        pooled representations (lane-dense: TN % 128 == 0)
    """
    n_c = w_ref.shape[0]
    n_h = x_ref.shape[1] // n_c
    acc = None
    for c in range(n_c):
        # VPU: sum the h-grid rows of channel c (cast first in case of bf16 images)
        s = x_ref[:, c * n_h, :].astype(jnp.float32)
        for hi in range(1, n_h):
            s = s + x_ref[:, c * n_h + hi, :].astype(jnp.float32)
        # MXU: contract over q = (p1, wi, p2); the wi-sum is folded into w_ref
        d = jnp.dot(s, w_ref[c], preferred_element_type=jnp.float32)
        acc = d if acc is None else acc + d
    o_ref[...] = (acc + b_ref[...]).astype(o_ref.dtype)


def prepare_params(weight, bias, patch_size, channels, image_hw):
    """One-time relayout of the nn.Linear(p*p*C, D) parameters (outside jit).

    Folds the (p1 p2 c) -> (c, q) permutation, the expansion over the w-grid
    index wi (so the w-grid sum happens inside the GEMM contraction), the 1/N
    mean scale, and the lane padding.  Runs once at model setup, not per call.
    """
    p, C = patch_size, channels
    H, W = image_hw
    h, w = H // p, W // p
    n_patches = h * w
    Dp, D = weight.shape
    assert Dp == p * p * C
    D_pad = _round_up(D, 128)
    w4 = jnp.asarray(weight, jnp.float32).reshape(p, p, C, D)    # (p1, p2, c, d)
    wc = jnp.transpose(w4, (2, 0, 1, 3))                         # (c, p1, p2, d)
    # duplicate over wi so the kernel lane run q = p1*W + wi*p + p2 matches,
    # and fold the 1/N mean scale here (zero per-call cost).
    wt = jnp.broadcast_to(wc[:, :, None, :, :], (C, p, w, p, D))
    w_eff = wt.reshape(C, p * W, D) * (1.0 / n_patches)
    w_eff = jnp.pad(w_eff, ((0, 0), (0, 0), (0, D_pad - D)))
    b_eff = jnp.pad(jnp.asarray(bias, jnp.float32), (0, D_pad - D)).reshape(1, D_pad)
    return w_eff, b_eff


@functools.partial(jax.jit, static_argnames=("patch_size", "out_dim"))
def architecture_forward(images, w_eff, b_eff, *, patch_size, out_dim):
    """images: (B, C, H, W) NCHW; (w_eff, b_eff) from prepare_params.
    Returns (B, out_dim) = mean over patches of the linear patch embedding."""
    B, C, H, W = images.shape
    p = patch_size
    h = H // p
    Cw, pW, D_pad = w_eff.shape
    assert Cw == C and pW == p * W and b_eff.shape == (1, D_pad)

    # FREE row-major view (no data movement): the Pallas kernel makes the only
    # pass over the image bytes.
    x = images.reshape(B, C * h, p * W)
    itemsize = images.dtype.itemsize

    # ---- tile sizing: minimal round-up slack, VMEM budgeted from real bytes --
    M8 = _round_up(B, 8)

    def tile_bytes(tm, tn):
        xb = tm * (C * h) * pW * itemsize        # image tile
        wb = C * pW * tn * 4                     # resident weight slice
        ob = tm * tn * 4                         # output tile
        return 2 * (xb + wb + ob + tn * 4)       # double-buffered pipeline

    TM = min(256, M8)
    while TM > 8 and tile_bytes(TM, D_pad) > (24 << 20):   # v7x-safe budget
        TM = max(8, _round_up(TM // 2, 8))
    grid_m = pl.cdiv(M8, TM)
    TM = _round_up(pl.cdiv(M8, grid_m), 8)       # balance tiles: slack < 8 rows
    M_pad = TM * grid_m

    # Weight is fetched exactly once in every configuration:
    #   grid_m >= 2 : single feature tile, constant weight block index (resident)
    #   grid_m == 1 : split features so a v7x second TensorCore gets work;
    #                 each weight slice is still read a single time.
    if grid_m >= 2 or D_pad < 256:
        TN = D_pad
    else:
        TN = 128
    grid_n = D_pad // TN

    if M_pad != B:
        # tiny (< TM rows) zero pad so the batch divides into whole tiles
        x = jnp.pad(x, ((0, M_pad - B), (0, 0), (0, 0)))

    vmem_limit = int(tile_bytes(TM, TN) + (TM * TN + TM * pW) * 4 + (2 << 20))
    vmem_limit = max(4 << 20, min(vmem_limit, 64 << 20))

    out = pl.pallas_call(
        _fused_kernel,
        out_shape=jax.ShapeDtypeStruct((M_pad, D_pad), jnp.float32),
        grid_spec=pltpu.PrefetchScalarGridSpec(
            num_scalar_prefetch=0,
            grid=(grid_m, grid_n),
            in_specs=[
                pl.BlockSpec((TM, C * h, pW), lambda i, j: (i, 0, 0)),
                pl.BlockSpec((C, pW, TN), lambda i, j: (0, 0, j)),
                pl.BlockSpec((1, TN), lambda i, j: (0, j)),
            ],
            out_specs=pl.BlockSpec((TM, TN), lambda i, j: (i, j)),
        ),
        compiler_params=pltpu.CompilerParams(
            dimension_semantics=("parallel", "parallel"),
            vmem_limit_bytes=vmem_limit,
        ),
    )(x, w_eff, b_eff)
    return out[:B, :out_dim]


if __name__ == "__main__":
    # Small shapes consistent with the module's forward:
    #   batch=2, channels=4, spatial=16x16, patch=8 -> N=4 patches, Dp=256, D=32
    B, C, H, W = 2, 4, 16, 16
    P = 8
    Dp = P * P * C
    D = 32

    key = jax.random.PRNGKey(0)
    k_img, k_w, k_b = jax.random.split(key, 3)

    images = jax.random.normal(k_img, (B, C, H, W), dtype=jnp.float32)
    # Deterministic synthetic parameters for the patch-embedding Linear(Dp, D).
    weight = jax.random.normal(k_w, (Dp, D), dtype=jnp.float32) * (1.0 / jnp.sqrt(Dp))
    bias = jax.random.normal(k_b, (D,), dtype=jnp.float32) * 0.01

    # One-time parameter relayout (hoisted out of the per-call path).
    w_eff, b_eff = prepare_params(weight, bias, P, C, (H, W))

    pooled = architecture_forward(images, w_eff, b_eff, patch_size=P, out_dim=D)
    jax.block_until_ready(pooled)

    # Pure-JAX reference of the ORIGINAL forward:
    #   patchify -> linear -> identity backbone -> mean over sequence.
    def patchify(x, p):
        b, c, hh, ww = x.shape
        hg, wg = hh // p, ww // p
        x = x.reshape(b, c, hg, p, wg, p)
        x = jnp.transpose(x, (0, 2, 4, 3, 5, 1))  # b h w p1 p2 c
        return x.reshape(b, hg * wg, p * p * c)

    ref = jnp.mean(patchify(images, P) @ weight + bias, axis=1)
    assert pooled.shape == (B, D)
    assert jnp.allclose(pooled, ref, atol=1e-4, rtol=1e-4)

    print("KERNEL_OK")
</pallas_src>

<mosaic_0001>
module attributes {stable_mosaic.version = 11 : i64} {
  func.func @_fused_kernel(%arg0: i32, %arg1: i32, %arg2: memref<8x8x128xf32, #tpu.memory_space<vmem>>, %arg3: memref<4x128x128xf32, #tpu.memory_space<vmem>>, %arg4: memref<1x128xf32, #tpu.memory_space<vmem>>, %arg5: memref<8x128xf32, #tpu.memory_space<vmem>>) attributes {dimension_semantics = [#tpu.dimension_semantics<parallel>, #tpu.dimension_semantics<parallel>], iteration_bounds = array<i64: 1, 1>, scalar_prefetch = 0 : i64, scratch_operands = 0 : i64, tpu.core_type = #tpu.core_type<tc>, window_params = [{transform_indices = @transform_0, window_bounds = array<i64: 8, 8, 128>}, {transform_indices = @transform_1, window_bounds = array<i64: 4, 128, 128>}, {transform_indices = @transform_2, window_bounds = array<i64: 1, 128>}, {transform_indices = @transform_3, window_bounds = array<i64: 8, 128>}]} {
    %c0 = arith.constant 0 : index
    %c0_0 = arith.constant 0 : index
    %c0_1 = arith.constant 0 : index
    %0 = vector.load %arg2[%c0, %c0_0, %c0_1] : memref<8x8x128xf32, #tpu.memory_space<vmem>>, vector<8x1x128xf32>
    %1 = vector.shape_cast %0 : vector<8x1x128xf32> to vector<8x128xf32>
    %c0_2 = arith.constant 0 : index
    %c1 = arith.constant 1 : index
    %c0_3 = arith.constant 0 : index
    %2 = vector.load %arg2[%c0_2, %c1, %c0_3] : memref<8x8x128xf32, #tpu.memory_space<vmem>>, vector<8x1x128xf32>
    %3 = vector.shape_cast %2 : vector<8x1x128xf32> to vector<8x128xf32>
    %4 = arith.addf %1, %3 : vector<8x128xf32>
    %c0_4 = arith.constant 0 : index
    %c0_5 = arith.constant 0 : index
    %c0_6 = arith.constant 0 : index
    %5 = vector.load %arg3[%c0_4, %c0_5, %c0_6] : memref<4x128x128xf32, #tpu.memory_space<vmem>>, vector<1x128x128xf32>
    %6 = vector.shape_cast %5 : vector<1x128x128xf32> to vector<128x128xf32>
    %cst = arith.constant dense<0.000000e+00> : vector<8x128xf32>
    %7 = tpu.matmul %4, %6, %cst {dimension_numbers = #tpu.dot_dimension_numbers<[1], [0], [0], [1], [0, 0, 1, 1], [], []>} : vector<8x128xf32>, vector<128x128xf32>, vector<8x128xf32> -> vector<8x128xf32>
    %c0_7 = arith.constant 0 : index
    %c2 = arith.constant 2 : index
    %c0_8 = arith.constant 0 : index
    %8 = vector.load %arg2[%c0_7, %c2, %c0_8] : memref<8x8x128xf32, #tpu.memory_space<vmem>>, vector<8x1x128xf32>
    %9 = vector.shape_cast %8 : vector<8x1x128xf32> to vector<8x128xf32>
    %c0_9 = arith.constant 0 : index
    %c3 = arith.constant 3 : index
    %c0_10 = arith.constant 0 : index
    %10 = vector.load %arg2[%c0_9, %c3, %c0_10] : memref<8x8x128xf32, #tpu.memory_space<vmem>>, vector<8x1x128xf32>
    %11 = vector.shape_cast %10 : vector<8x1x128xf32> to vector<8x128xf32>
    %12 = arith.addf %9, %11 : vector<8x128xf32>
    %c1_11 = arith.constant 1 : index
    %c0_12 = arith.constant 0 : index
    %c0_13 = arith.constant 0 : index
    %13 = vector.load %arg3[%c1_11, %c0_12, %c0_13] : memref<4x128x128xf32, #tpu.memory_space<vmem>>, vector<1x128x128xf32>
    %14 = vector.shape_cast %13 : vector<1x128x128xf32> to vector<128x128xf32>
    %cst_14 = arith.constant dense<0.000000e+00> : vector<8x128xf32>
    %15 = tpu.matmul %12, %14, %cst_14 {dimension_numbers = #tpu.dot_dimension_numbers<[1], [0], [0], [1], [0, 0, 1, 1], [], []>} : vector<8x128xf32>, vector<128x128xf32>, vector<8x128xf32> -> vector<8x128xf32>
    %16 = arith.addf %7, %15 : vector<8x128xf32>
    %c0_15 = arith.constant 0 : index
    %c4 = arith.constant 4 : index
    %c0_16 = arith.constant 0 : index
    %17 = vector.load %arg2[%c0_15, %c4, %c0_16] : memref<8x8x128xf32, #tpu.memory_space<vmem>>, vector<8x1x128xf32>
    %18 = vector.shape_cast %17 : vector<8x1x128xf32> to vector<8x128xf32>
    %c0_17 = arith.constant 0 : index
    %c5 = arith.constant 5 : index
    %c0_18 = arith.constant 0 : index
    %19 = vector.load %arg2[%c0_17, %c5, %c0_18] : memref<8x8x128xf32, #tpu.memory_space<vmem>>, vector<8x1x128xf32>
    %20 = vector.shape_cast %19 : vector<8x1x128xf32> to vector<8x128xf32>
    %21 = arith.addf %18, %20 : vector<8x128xf32>
    %c2_19 = arith.constant 2 : index
    %c0_20 = arith.constant 0 : index
    %c0_21 = arith.constant 0 : index
    %22 = vector.load %arg3[%c2_19, %c0_20, %c0_21] : memref<4x128x128xf32, #tpu.memory_space<vmem>>, vector<1x128x128xf32>
    %23 = vector.shape_cast %22 : vector<1x128x128xf32> to vector<128x128xf32>
    %cst_22 = arith.constant dense<0.000000e+00> : vector<8x128xf32>
    %24 = tpu.matmul %21, %23, %cst_22 {dimension_numbers = #tpu.dot_dimension_numbers<[1], [0], [0], [1], [0, 0, 1, 1], [], []>} : vector<8x128xf32>, vector<128x128xf32>, vector<8x128xf32> -> vector<8x128xf32>
    %25 = arith.addf %16, %24 : vector<8x128xf32>
    %c0_23 = arith.constant 0 : index
    %c6 = arith.constant 6 : index
    %c0_24 = arith.constant 0 : index
    %26 = vector.load %arg2[%c0_23, %c6, %c0_24] : memref<8x8x128xf32, #tpu.memory_space<vmem>>, vector<8x1x128xf32>
    %27 = vector.shape_cast %26 : vector<8x1x128xf32> to vector<8x128xf32>
    %c0_25 = arith.constant 0 : index
    %c7 = arith.constant 7 : index
    %c0_26 = arith.constant 0 : index
    %28 = vector.load %arg2[%c0_25, %c7, %c0_26] : memref<8x8x128xf32, #tpu.memory_space<vmem>>, vector<8x1x128xf32>
    %29 = vector.shape_cast %28 : vector<8x1x128xf32> to vector<8x128xf32>
    %30 = arith.addf %27, %29 : vector<8x128xf32>
    %c3_27 = arith.constant 3 : index
    %c0_28 = arith.constant 0 : index
    %c0_29 = arith.constant 0 : index
    %31 = vector.load %arg3[%c3_27, %c0_28, %c0_29] : memref<4x128x128xf32, #tpu.memory_space<vmem>>, vector<1x128x128xf32>
    %32 = vector.shape_cast %31 : vector<1x128x128xf32> to vector<128x128xf32>
    %cst_30 = arith.constant dense<0.000000e+00> : vector<8x128xf32>
    %33 = tpu.matmul %30, %32, %cst_30 {dimension_numbers = #tpu.dot_dimension_numbers<[1], [0], [0], [1], [0, 0, 1, 1], [], []>} : vector<8x128xf32>, vector<128x128xf32>, vector<8x128xf32> -> vector<8x128xf32>
    %34 = arith.addf %25, %33 : vector<8x128xf32>
    %c0_31 = arith.constant 0 : index
    %c0_32 = arith.constant 0 : index
    %35 = vector.load %arg4[%c0_31, %c0_32] : memref<1x128xf32, #tpu.memory_space<vmem>>, vector<1x128xf32>
    %36 = vector.broadcast %35 : vector<1x128xf32> to vector<8x128xf32>
    %37 = arith.addf %34, %36 : vector<8x128xf32>
    %c0_33 = arith.constant 0 : index
    %c0_34 = arith.constant 0 : index
    %38 = vector.load %arg5[%c0_33, %c0_34] : memref<8x128xf32, #tpu.memory_space<vmem>>, vector<8x128xf32>
    tpu.vector_store %arg5[%c0_33, %c0_34], %37 {strides = array<i32>} : memref<8x128xf32, #tpu.memory_space<vmem>>, vector<8x128xf32>,
    return
  }
  func.func @transform_0(%arg0: i32, %arg1: i32) -> (i32, i32, i32) {
    %c0_i32 = arith.constant 0 : i32
    %c0_i32_0 = arith.constant 0 : i32
    %c0_i32_1 = arith.constant 0 : i32
    return %arg0, %c0_i32, %c0_i32_0 : i32, i32, i32
  }
  func.func @transform_1(%arg0: i32, %arg1: i32) -> (i32, i32, i32) {
    %c0_i32 = arith.constant 0 : i32
    %c0_i32_0 = arith.constant 0 : i32
    %c0_i32_1 = arith.constant 0 : i32
    return %c0_i32, %c0_i32_0, %arg1 : i32, i32, i32
  }
  func.func @transform_2(%arg0: i32, %arg1: i32) -> (i32, i32) {
    %c0_i32 = arith.constant 0 : i32
    %c0_i32_0 = arith.constant 0 : i32
    return %c0_i32, %arg1 : i32, i32
  }
  func.func @transform_3(%arg0: i32, %arg1: i32) -> (i32, i32) {
    %c0_i32 = arith.constant 0 : i32
    return %arg0, %arg1 : i32, i32
  }
}

</mosaic_0001>

<llo_original>
// kernel: architecture_forward.1
$region0: #{architecture_forward.1}
  #allocation0 [shape = 'u32[]', space=smem, size = 0x4, offset = 0x4, fixed_abs, tag = 'smem constant byte address 0x4 - core index']
  #allocation1 [shape = 'u32[144,128]{1,0:T(1,128)}', space=vmem, size = 0x12000, scoped, tag = 'internal scratch']
  %s0 = inlined_call_operand.vmem [shape: f32[8,8,128], index: 0, kind: input, shape index: {}]
  %s1 = inlined_call_operand.hbm [shape: f32[4,128,128], index: 1, kind: input, shape index: {}]
  %s2 = inlined_call_operand.vmem [shape: f32[1,128], index: 2, kind: input, shape index: {}]
  %s3 = inlined_call_operand.vmem [shape: f32[8,128], index: 3, kind: output, shape index: {}]
  %s4 = sld [smem:[#allocation0]]
  $region26: #{architecture_forward.1} parent=0
    _
  %s6 = ssub.s32 1, %s4
  %s7 = scalar_select 0, %s6, %s4
  $region1: #{architecture_forward.1} parent=0
    #allocation2 [shape = 'u8[262144]{0}', space=vmem, size = 0x40000, scoped, tag = 'input window, operand 1, single buffered']
    #allocation3 [shape = 's32[1]{0}', space=sflag, size = 0x4, scoped, tag = 'scoped memory for architecture_forward.1']
    %8 = vsyncpa [#allocation3], 0
    // Predicated region
    $region2: #{architecture_forward.1} parent=1 // pred_check
      _
    $region3: #{architecture_forward.1} parent=1 // pred_check_branch
      %10 = sbr.rel (0) target = $region5
    $region4: #{architecture_forward.1} parent=1 // pred_region
      _
    $region5: #{architecture_forward.1} parent=1 // pred_fallthru
      _
    // Predicated region
    $region6: #{architecture_forward.1} parent=1 // pred_check
      _
    $region7: #{architecture_forward.1} parent=1 // pred_check_branch
      %12 = sbr.rel (0) target = $region9
    $region8: #{architecture_forward.1} parent=1 // pred_region
      %s14 = ssub.s32 8192, 8192
      %15 = vsyncadd [#allocation3], %s14
      %s16 = sshll.u32 [#allocation2], 4
      %s17 = int_to_ptr.vmem [resolvable:$true] %s16
      %22 = dma.hbm_to_vmem [thread:$0]  %s1, 8192, %s17, [#allocation3], 128, 128, 8
    $region9: #{architecture_forward.1} parent=1 // pred_fallthru
      _
    // Predicated region
    $region10: #{architecture_forward.1} parent=1 // pred_check
      _
    $region11: #{architecture_forward.1} parent=1 // pred_check_branch
      %24 = sbr.rel (0) target = $region13
    $region12: #{architecture_forward.1} parent=1 // pred_region
      _
    $region13: #{architecture_forward.1} parent=1 // pred_fallthru
      _
    // Predicated region
    $region14: #{architecture_forward.1} parent=1 // pred_check
      _
    $region15: #{architecture_forward.1} parent=1 // pred_check_branch
      %26 = sbr.rel (0) target = $region17
    $region16: #{architecture_forward.1} parent=1 // pred_region
      %27 = dma.done [#allocation3], 8192
    $region17: #{architecture_forward.1} parent=1 // pred_fallthru
      _
    %v28 = vld [vmem:[%s0] sm:$0x1]
    %v29 = vld [vmem:[%s0 + $0x8] sm:$0x1]
    %v30 = vld [vmem:[%s0 + $0x10] sm:$0x1]
    %v31 = vld [vmem:[%s0 + $0x18] sm:$0x1]
    %v32 = vld [vmem:[%s0 + $0x20] sm:$0x1]
    %v33 = vld [vmem:[%s0 + $0x28] sm:$0x1]
    %v34 = vld [vmem:[%s0 + $0x30] sm:$0x1]
    %v35 = vld [vmem:[%s0 + $0x38] sm:$0x1]
    %v36 = vld [vmem:[%s0 + $0x1] sm:$0x1]
    %v37 = vld [vmem:[%s0 + $0x9] sm:$0x1]
    %v38 = vld [vmem:[%s0 + $0x11] sm:$0x1]
    %v39 = vld [vmem:[%s0 + $0x19] sm:$0x1]
    %v40 = vld [vmem:[%s0 + $0x21] sm:$0x1]
    %v41 = vld [vmem:[%s0 + $0x29] sm:$0x1]
    %v42 = vld [vmem:[%s0 + $0x31] sm:$0x1]
    %v43 = vld [vmem:[%s0 + $0x39] sm:$0x1]
    %v44 = vadd.f32 %v28, %v36
    %v45 = vadd.f32 %v29, %v37
    %v46 = vadd.f32 %v30, %v38
    %v47 = vadd.f32 %v31, %v39
    %v48 = vadd.f32 %v32, %v40
    %v49 = vadd.f32 %v33, %v41
    %v50 = vadd.f32 %v34, %v42
    %v51 = vadd.f32 %v35, %v43
    %v52 = vld [vmem:[#allocation2] sm:$0xff]
    %v53 = vld [vmem:[#allocation2 + $0x8] sm:$0xff]
    %v54 = vld [vmem:[#allocation2 + $0x10] sm:$0xff]
    %v55 = vld [vmem:[#allocation2 + $0x18] sm:$0xff]
    %v56 = vld [vmem:[#allocation2 + $0x20] sm:$0xff]
    %v57 = vld [vmem:[#allocation2 + $0x28] sm:$0xff]
    %v58 = vld [vmem:[#allocation2 + $0x30] sm:$0xff]
    %v59 = vld [vmem:[#allocation2 + $0x38] sm:$0xff]
    %v60 = vld [vmem:[#allocation2 + $0x40] sm:$0xff]
    %v61 = vld [vmem:[#allocation2 + $0x48] sm:$0xff]
    %v62 = vld [vmem:[#allocation2 + $0x50] sm:$0xff]
    %v63 = vld [vmem:[#allocation2 + $0x58] sm:$0xff]
    %v64 = vld [vmem:[#allocation2 + $0x60] sm:$0xff]
    %v65 = vld [vmem:[#allocation2 + $0x68] sm:$0xff]
    %v66 = vld [vmem:[#allocation2 + $0x70] sm:$0xff]
    %v67 = vld [vmem:[#allocation2 + $0x78] sm:$0xff]
    %v68 = vld [vmem:[%s0 + $0x2] sm:$0x1]
    %v69 = vld [vmem:[%s0 + $0xa] sm:$0x1]
    %v70 = vld [vmem:[%s0 + $0x12] sm:$0x1]
    %v71 = vld [vmem:[%s0 + $0x1a] sm:$0x1]
    %v72 = vld [vmem:[%s0 + $0x22] sm:$0x1]
    %v73 = vld [vmem:[%s0 + $0x2a] sm:$0x1]
    %v74 = vld [vmem:[%s0 + $0x32] sm:$0x1]
    %v75 = vld [vmem:[%s0 + $0x3a] sm:$0x1]
    %v76 = vld [vmem:[%s0 + $0x3] sm:$0x1]
    %v77 = vld [vmem:[%s0 + $0xb] sm:$0x1]
    %v78 = vld [vmem:[%s0 + $0x13] sm:$0x1]
    %v79 = vld [vmem:[%s0 + $0x1b] sm:$0x1]
    %v80 = vld [vmem:[%s0 + $0x23] sm:$0x1]
    %v81 = vld [vmem:[%s0 + $0x2b] sm:$0x1]
    %v82 = vld [vmem:[%s0 + $0x33] sm:$0x1]
    %v83 = vld [vmem:[%s0 + $0x3b] sm:$0x1]
    %v84 = vadd.f32 %v68, %v76
    %v85 = vadd.f32 %v69, %v77
    %v86 = vadd.f32 %v70, %v78
    %v87 = vadd.f32 %v71, %v79
    %v88 = vadd.f32 %v72, %v80
    %v89 = vadd.f32 %v73, %v81
    %v90 = vadd.f32 %v74, %v82
    %v91 = vadd.f32 %v75, %v83
    %s92 = scalar_lea.vmem [#allocation2], 128
    %v93 = vld [vmem:[%s92] sm:$0xff]
    %v94 = vld [vmem:[%s92 + $0x8] sm:$0xff]
    %v95 = vld [vmem:[%s92 + $0x10] sm:$0xff]
    %v96 = vld [vmem:[%s92 + $0x18] sm:$0xff]
    %v97 = vld [vmem:[%s92 + $0x20] sm:$0xff]
    %v98 = vld [vmem:[%s92 + $0x28] sm:$0xff]
    %v99 = vld [vmem:[%s92 + $0x30] sm:$0xff]
    %v100 = vld [vmem:[%s92 + $0x38] sm:$0xff]
    %v101 = vld [vmem:[%s92 + $0x40] sm:$0xff]
    %v102 = vld [vmem:[%s92 + $0x48] sm:$0xff]
    %v103 = vld [vmem:[%s92 + $0x50] sm:$0xff]
    %v104 = vld [vmem:[%s92 + $0x58] sm:$0xff]
    %v105 = vld [vmem:[%s92 + $0x60] sm:$0xff]
    %v106 = vld [vmem:[%s92 + $0x68] sm:$0xff]
    %v107 = vld [vmem:[%s92 + $0x70] sm:$0xff]
    %v108 = vld [vmem:[%s92 + $0x78] sm:$0xff]
    %v117 = vrot.slane %v85, 7
    %vm118 = vcmask 1041409
    %v119 = vsel %vm118, %v117, %v84
    %v120 = vrot.slane %v86, 6
    %vm121 = vcmask 1042434
    %v122 = vsel %vm121, %v120, %v119
    %v123 = vrot.slane %v87, 5
    %vm124 = vcmask 1043459
    %v125 = vsel %vm124, %v123, %v122
    %v126 = vrot.slane %v88, 4
    %vm127 = vcmask 1044484
    %v128 = vsel %vm127, %v126, %v125
    %v129 = vrot.slane %v89, 3
    %vm130 = vcmask 1045509
    %v131 = vsel %vm130, %v129, %v128
    %v132 = vrot.slane %v90, 2
    %vm133 = vcmask 1046534
    %v134 = vsel %vm133, %v132, %v131
    %v135 = vrot.slane %v91, 1
    %vm136 = vcmask 1047559
    %v137 = vsel %vm136, %v135, %v134
    %139 = vmatprep.subr.mxu0 0.0
    %140 = vmatpush1.msra.mxu0 %v93
    %141 = vmatprep.subr.mxu0 0.0
    %142 = vmatpush1.msra.mxu0 %v94
    %143 = vmatprep.subr.mxu0 0.0
    %144 = vmatpush1.msra.mxu0 %v95
    %145 = vmatprep.subr.mxu0 0.0
    %146 = vmatpush1.msra.mxu0 %v96
    %147 = vmatprep.subr.mxu0 0.0
    %148 = vmatpush1.msra.mxu0 %v97
    %149 = vmatprep.subr.mxu0 0.0
    %150 = vmatpush1.msra.mxu0 %v98
    %151 = vmatprep.subr.mxu0 0.0
    %152 = vmatpush1.msra.mxu0 %v99
    %153 = vmatprep.subr.mxu0 0.0
    %154 = vmatpush1.msra.mxu0 %v100
    %155 = vmatprep.subr.mxu0 0.0
    %156 = vmatpush1.msra.mxu0 %v101
    %157 = vmatprep.subr.mxu0 0.0
    %158 = vmatpush1.msra.mxu0 %v102
    %159 = vmatprep.subr.mxu0 0.0
    %160 = vmatpush1.msra.mxu0 %v103
    %161 = vmatprep.subr.mxu0 0.0
    %162 = vmatpush1.msra.mxu0 %v104
    %163 = vmatprep.subr.mxu0 0.0
    %164 = vmatpush1.msra.mxu0 %v105
    %165 = vmatprep.subr.mxu0 0.0
    %166 = vmatpush1.msra.mxu0 %v106
    %167 = vmatprep.subr.mxu0 0.0
    %168 = vmatpush1.msra.mxu0 %v107
    %169 = vmatprep.subr.mxu0 0.0
    %170 = vmatpush1.msra.mxu0 %v108
    %171 = vmatprep.subr.mxu0 0.0
    %172 = vmatpush1.msra.mxu0 0.0
    %173 = vmatprep.subr.mxu0 0.0
    %174 = vmatpush1.msra.mxu0 0.0
    %175 = vmatprep.subr.mxu0 0.0
    %176 = vmatpush1.msra.mxu0 0.0
    %177 = vmatprep.subr.mxu0 0.0
    %178 = vmatpush1.msra.mxu0 0.0
    %179 = vmatprep.subr.mxu0 0.0
    %180 = vmatpush1.msra.mxu0 0.0
    %181 = vmatprep.subr.mxu0 0.0
    %182 = vmatpush1.msra.mxu0 0.0
    %183 = vmatprep.subr.mxu0 0.0
    %184 = vmatpush1.msra.mxu0 0.0
    %185 = vmatprep.subr.mxu0 0.0
    %186 = vmatpush1.msra.mxu0 0.0
    %187 = vmatprep.subr.mxu0 0.0
    %188 = vmatpush1.msra.mxu0 0.0
    %189 = vmatprep.subr.mxu0 0.0
    %190 = vmatpush1.msra.mxu0 0.0
    %191 = vmatprep.subr.mxu0 0.0
    %192 = vmatpush1.msra.mxu0 0.0
    %193 = vmatprep.subr.mxu0 0.0
    %194 = vmatpush1.msra.mxu0 0.0
    %195 = vmatprep.subr.mxu0 0.0
    %196 = vmatpush1.msra.mxu0 0.0
    %197 = vmatprep.subr.mxu0 0.0
    %198 = vmatpush1.msra.mxu0 0.0
    %199 = vmatprep.subr.mxu0 0.0
    %200 = vmatpush1.msra.mxu0 0.0
    %201 = vmatprep.subr.mxu0 0.0
    %202 = vmatpush1.msra.mxu0 0.0
    %203 = vmatprep.mubr.f32.mxu0 0.0
    %204 = vmatmul.mubr.f32.gmra.mrb[0].mxu0 %v137
    %v205 = vpop.f32.mrb[0].mxu0
    %v206 = vadd.f32 0.0, %v205
    %v207 = vpop.f32.mrb[0].mxu0
    %208 = vdwg.mxu0
    %v217 = vrot.slane %v45, 7
    %v218 = vsel %vm118, %v217, %v44
    %v219 = vrot.slane %v46, 6
    %v220 = vsel %vm121, %v219, %v218
    %v221 = vrot.slane %v47, 5
    %v222 = vsel %vm124, %v221, %v220
    %v223 = vrot.slane %v48, 4
    %v224 = vsel %vm127, %v223, %v222
    %v225 = vrot.slane %v49, 3
    %v226 = vsel %vm130, %v225, %v224
    %v227 = vrot.slane %v50, 2
    %v228 = vsel %vm133, %v227, %v226
    %v229 = vrot.slane %v51, 1
    %v230 = vsel %vm136, %v229, %v228
    %232 = vmatprep.subr.mxu0 0.0
    %233 = vmatpush1.msra.mxu0 %v52
    %234 = vmatprep.subr.mxu0 0.0
    %235 = vmatpush1.msra.mxu0 %v53
    %236 = vmatprep.subr.mxu0 0.0
    %237 = vmatpush1.msra.mxu0 %v54
    %238 = vmatprep.subr.mxu0 0.0
    %239 = vmatpush1.msra.mxu0 %v55
    %240 = vmatprep.subr.mxu0 0.0
    %241 = vmatpush1.msra.mxu0 %v56
    %242 = vmatprep.subr.mxu0 0.0
    %243 = vmatpush1.msra.mxu0 %v57
    %244 = vmatprep.subr.mxu0 0.0
    %245 = vmatpush1.msra.mxu0 %v58
    %246 = vmatprep.subr.mxu0 0.0
    %247 = vmatpush1.msra.mxu0 %v59
    %248 = vmatprep.subr.mxu0 0.0
    %249 = vmatpush1.msra.mxu0 %v60
    %250 = vmatprep.subr.mxu0 0.0
    %251 = vmatpush1.msra.mxu0 %v61
    %252 = vmatprep.subr.mxu0 0.0
    %253 = vmatpush1.msra.mxu0 %v62
    %254 = vmatprep.subr.mxu0 0.0
    %255 = vmatpush1.msra.mxu0 %v63
    %256 = vmatprep.subr.mxu0 0.0
    %257 = vmatpush1.msra.mxu0 %v64
    %258 = vmatprep.subr.mxu0 0.0
    %259 = vmatpush1.msra.mxu0 %v65
    %260 = vmatprep.subr.mxu0 0.0
    %261 = vmatpush1.msra.mxu0 %v66
    %262 = vmatprep.subr.mxu0 0.0
    %263 = vmatpush1.msra.mxu0 %v67
    %264 = vmatprep.subr.mxu0 0.0
    %265 = vmatpush1.msra.mxu0 0.0
    %266 = vmatprep.subr.mxu0 0.0
    %267 = vmatpush1.msra.mxu0 0.0
    %268 = vmatprep.subr.mxu0 0.0
    %269 = vmatpush1.msra.mxu0 0.0
    %270 = vmatprep.subr.mxu0 0.0
    %271 = vmatpush1.msra.mxu0 0.0
    %272 = vmatprep.subr.mxu0 0.0
    %273 = vmatpush1.msra.mxu0 0.0
    %274 = vmatprep.subr.mxu0 0.0
    %275 = vmatpush1.msra.mxu0 0.0
    %276 = vmatprep.subr.mxu0 0.0
    %277 = vmatpush1.msra.mxu0 0.0
    %278 = vmatprep.subr.mxu0 0.0
    %279 = vmatpush1.msra.mxu0 0.0
    %280 = vmatprep.subr.mxu0 0.0
    %281 = vmatpush1.msra.mxu0 0.0
    %282 = vmatprep.subr.mxu0 0.0
    %283 = vmatpush1.msra.mxu0 0.0
    %284 = vmatprep.subr.mxu0 0.0
    %285 = vmatpush1.msra.mxu0 0.0
    %286 = vmatprep.subr.mxu0 0.0
    %287 = vmatpush1.msra.mxu0 0.0
    %288 = vmatprep.subr.mxu0 0.0
    %289 = vmatpush1.msra.mxu0 0.0
    %290 = vmatprep.subr.mxu0 0.0
    %291 = vmatpush1.msra.mxu0 0.0
    %292 = vmatprep.subr.mxu0 0.0
    %293 = vmatpush1.msra.mxu0 0.0
    %294 = vmatprep.subr.mxu0 0.0
    %295 = vmatpush1.msra.mxu0 0.0
    %296 = vmatprep.mubr.f32.mxu0 0.0
    %297 = vmatmul.mubr.f32.gmra.mrb[0].mxu0 %v230
    %v298 = vpop.f32.mrb[0].mxu0
    %v299 = vadd.f32 %v206, %v298
    %v300 = vpop.f32.mrb[0].mxu0
    %301 = vdwg.mxu0
    %v302 = vld [vmem:[%s0 + $0x4] sm:$0x1]
    %v303 = vld [vmem:[%s0 + $0xc] sm:$0x1]
    %v304 = vld [vmem:[%s0 + $0x14] sm:$0x1]
    %v305 = vld [vmem:[%s0 + $0x1c] sm:$0x1]
    %v306 = vld [vmem:[%s0 + $0x24] sm:$0x1]
    %v307 = vld [vmem:[%s0 + $0x2c] sm:$0x1]
    %v308 = vld [vmem:[%s0 + $0x34] sm:$0x1]
    %v309 = vld [vmem:[%s0 + $0x3c] sm:$0x1]
    %v310 = vld [vmem:[%s0 + $0x5] sm:$0x1]
    %v311 = vld [vmem:[%s0 + $0xd] sm:$0x1]
    %v312 = vld [vmem:[%s0 + $0x15] sm:$0x1]
    %v313 = vld [vmem:[%s0 + $0x1d] sm:$0x1]
    %v314 = vld [vmem:[%s0 + $0x25] sm:$0x1]
    %v315 = vld [vmem:[%s0 + $0x2d] sm:$0x1]
    %v316 = vld [vmem:[%s0 + $0x35] sm:$0x1]
    %v317 = vld [vmem:[%s0 + $0x3d] sm:$0x1]
    %v318 = vadd.f32 %v302, %v310
    %v319 = vadd.f32 %v303, %v311
    %v320 = vadd.f32 %v304, %v312
    %v321 = vadd.f32 %v305, %v313
    %v322 = vadd.f32 %v306, %v314
    %v323 = vadd.f32 %v307, %v315
    %v324 = vadd.f32 %v308, %v316
    %v325 = vadd.f32 %v309, %v317
    %s326 = scalar_lea.vmem [#allocation2], 256
    %v327 = vld [vmem:[%s326] sm:$0xff]
    %v328 = vld [vmem:[%s326 + $0x8] sm:$0xff]
    %v329 = vld [vmem:[%s326 + $0x10] sm:$0xff]
    %v330 = vld [vmem:[%s326 + $0x18] sm:$0xff]
    %v331 = vld [vmem:[%s326 + $0x20] sm:$0xff]
    %v332 = vld [vmem:[%s326 + $0x28] sm:$0xff]
    %v333 = vld [vmem:[%s326 + $0x30] sm:$0xff]
    %v334 = vld [vmem:[%s326 + $0x38] sm:$0xff]
    %v335 = vld [vmem:[%s326 + $0x40] sm:$0xff]
    %v336 = vld [vmem:[%s326 + $0x48] sm:$0xff]
    %v337 = vld [vmem:[%s326 + $0x50] sm:$0xff]
    %v338 = vld [vmem:[%s326 + $0x58] sm:$0xff]
    %v339 = vld [vmem:[%s326 + $0x60] sm:$0xff]
    %v340 = vld [vmem:[%s326 + $0x68] sm:$0xff]
    %v341 = vld [vmem:[%s326 + $0x70] sm:$0xff]
    %v342 = vld [vmem:[%s326 + $0x78] sm:$0xff]
    %v351 = vrot.slane %v319, 7
    %v352 = vsel %vm118, %v351, %v318
    %v353 = vrot.slane %v320, 6
    %v354 = vsel %vm121, %v353, %v352
    %v355 = vrot.slane %v321, 5
    %v356 = vsel %vm124, %v355, %v354
    %v357 = vrot.slane %v322, 4
    %v358 = vsel %vm127, %v357, %v356
    %v359 = vrot.slane %v323, 3
    %v360 = vsel %vm130, %v359, %v358
    %v361 = vrot.slane %v324, 2
    %v362 = vsel %vm133, %v361, %v360
    %v363 = vrot.slane %v325, 1
    %v364 = vsel %vm136, %v363, %v362
    %366 = vmatprep.subr.mxu0 0.0
    %367 = vmatpush1.msra.mxu0 %v327
    %368 = vmatprep.subr.mxu0 0.0
    %369 = vmatpush1.msra.mxu0 %v328
    %370 = vmatprep.subr.mxu0 0.0
    %371 = vmatpush1.msra.mxu0 %v329
    %372 = vmatprep.subr.mxu0 0.0
    %373 = vmatpush1.msra.mxu0 %v330
    %374 = vmatprep.subr.mxu0 0.0
    %375 = vmatpush1.msra.mxu0 %v331
    %376 = vmatprep.subr.mxu0 0.0
    %377 = vmatpush1.msra.mxu0 %v332
    %378 = vmatprep.subr.mxu0 0.0
    %379 = vmatpush1.msra.mxu0 %v333
    %380 = vmatprep.subr.mxu0 0.0
    %381 = vmatpush1.msra.mxu0 %v334
    %382 = vmatprep.subr.mxu0 0.0
    %383 = vmatpush1.msra.mxu0 %v335
    %384 = vmatprep.subr.mxu0 0.0
    %385 = vmatpush1.msra.mxu0 %v336
    %386 = vmatprep.subr.mxu0 0.0
    %387 = vmatpush1.msra.mxu0 %v337
    %388 = vmatprep.subr.mxu0 0.0
    %389 = vmatpush1.msra.mxu0 %v338
    %390 = vmatprep.subr.mxu0 0.0
    %391 = vmatpush1.msra.mxu0 %v339
    %392 = vmatprep.subr.mxu0 0.0
    %393 = vmatpush1.msra.mxu0 %v340
    %394 = vmatprep.subr.mxu0 0.0
    %395 = vmatpush1.msra.mxu0 %v341
    %396 = vmatprep.subr.mxu0 0.0
    %397 = vmatpush1.msra.mxu0 %v342
    %398 = vmatprep.subr.mxu0 0.0
    %399 = vmatpush1.msra.mxu0 0.0
    %400 = vmatprep.subr.mxu0 0.0
    %401 = vmatpush1.msra.mxu0 0.0
    %402 = vmatprep.subr.mxu0 0.0
    %403 = vmatpush1.msra.mxu0 0.0
    %404 = vmatprep.subr.mxu0 0.0
    %405 = vmatpush1.msra.mxu0 0.0
    %406 = vmatprep.subr.mxu0 0.0
    %407 = vmatpush1.msra.mxu0 0.0
    %408 = vmatprep.subr.mxu0 0.0
    %409 = vmatpush1.msra.mxu0 0.0
    %410 = vmatprep.subr.mxu0 0.0
    %411 = vmatpush1.msra.mxu0 0.0
    %412 = vmatprep.subr.mxu0 0.0
    %413 = vmatpush1.msra.mxu0 0.0
    %414 = vmatprep.subr.mxu0 0.0
    %415 = vmatpush1.msra.mxu0 0.0
    %416 = vmatprep.subr.mxu0 0.0
    %417 = vmatpush1.msra.mxu0 0.0
    %418 = vmatprep.subr.mxu0 0.0
    %419 = vmatpush1.msra.mxu0 0.0
    %420 = vmatprep.subr.mxu0 0.0
    %421 = vmatpush1.msra.mxu0 0.0
    %422 = vmatprep.subr.mxu0 0.0
    %423 = vmatpush1.msra.mxu0 0.0
    %424 = vmatprep.subr.mxu0 0.0
    %425 = vmatpush1.msra.mxu0 0.0
    %426 = vmatprep.subr.mxu0 0.0
    %427 = vmatpush1.msra.mxu0 0.0
    %428 = vmatprep.subr.mxu0 0.0
    %429 = vmatpush1.msra.mxu0 0.0
    %430 = vmatprep.mubr.f32.mxu0 0.0
    %431 = vmatmul.mubr.f32.gmra.mrb[0].mxu0 %v364
    %v432 = vpop.f32.mrb[0].mxu0
    %v433 = vadd.f32 0.0, %v432
    %v434 = vpop.f32.mrb[0].mxu0
    %435 = vdwg.mxu0
    %v436 = vadd.f32 %v299, %v433
    %v437 = vld [vmem:[%s0 + $0x6] sm:$0x1]
    %v438 = vld [vmem:[%s0 + $0xe] sm:$0x1]
    %v439 = vld [vmem:[%s0 + $0x16] sm:$0x1]
    %v440 = vld [vmem:[%s0 + $0x1e] sm:$0x1]
    %v441 = vld [vmem:[%s0 + $0x26] sm:$0x1]
    %v442 = vld [vmem:[%s0 + $0x2e] sm:$0x1]
    %v443 = vld [vmem:[%s0 + $0x36] sm:$0x1]
    %v444 = vld [vmem:[%s0 + $0x3e] sm:$0x1]
    %v445 = vld [vmem:[%s0 + $0x7] sm:$0x1]
    %v446 = vld [vmem:[%s0 + $0xf] sm:$0x1]
    %v447 = vld [vmem:[%s0 + $0x17] sm:$0x1]
    %v448 = vld [vmem:[%s0 + $0x1f] sm:$0x1]
    %v449 = vld [vmem:[%s0 + $0x27] sm:$0x1]
    %v450 = vld [vmem:[%s0 + $0x2f] sm:$0x1]
    %v451 = vld [vmem:[%s0 + $0x37] sm:$0x1]
    %v452 = vld [vmem:[%s0 + $0x3f] sm:$0x1]
    %v453 = vadd.f32 %v437, %v445
    %v454 = vadd.f32 %v438, %v446
    %v455 = vadd.f32 %v439, %v447
    %v456 = vadd.f32 %v440, %v448
    %v457 = vadd.f32 %v441, %v449
    %v458 = vadd.f32 %v442, %v450
    %v459 = vadd.f32 %v443, %v451
    %v460 = vadd.f32 %v444, %v452
    %s461 = scalar_lea.vmem [#allocation2], 384
    %v462 = vld [vmem:[%s461] sm:$0xff]
    %v463 = vld [vmem:[%s461 + $0x8] sm:$0xff]
    %v464 = vld [vmem:[%s461 + $0x10] sm:$0xff]
    %v465 = vld [vmem:[%s461 + $0x18] sm:$0xff]
    %v466 = vld [vmem:[%s461 + $0x20] sm:$0xff]
    %v467 = vld [vmem:[%s461 + $0x28] sm:$0xff]
    %v468 = vld [vmem:[%s461 + $0x30] sm:$0xff]
    %v469 = vld [vmem:[%s461 + $0x38] sm:$0xff]
    %v470 = vld [vmem:[%s461 + $0x40] sm:$0xff]
    %v471 = vld [vmem:[%s461 + $0x48] sm:$0xff]
    %v472 = vld [vmem:[%s461 + $0x50] sm:$0xff]
    %v473 = vld [vmem:[%s461 + $0x58] sm:$0xff]
    %v474 = vld [vmem:[%s461 + $0x60] sm:$0xff]
    %v475 = vld [vmem:[%s461 + $0x68] sm:$0xff]
    %v476 = vld [vmem:[%s461 + $0x70] sm:$0xff]
    %v477 = vld [vmem:[%s461 + $0x78] sm:$0xff]
    %v486 = vrot.slane %v454, 7
    %v487 = vsel %vm118, %v486, %v453
    %v488 = vrot.slane %v455, 6
    %v489 = vsel %vm121, %v488, %v487
    %v490 = vrot.slane %v456, 5
    %v491 = vsel %vm124, %v490, %v489
    %v492 = vrot.slane %v457, 4
    %v493 = vsel %vm127, %v492, %v491
    %v494 = vrot.slane %v458, 3
    %v495 = vsel %vm130, %v494, %v493
    %v496 = vrot.slane %v459, 2
    %v497 = vsel %vm133, %v496, %v495
    %v498 = vrot.slane %v460, 1
    %v499 = vsel %vm136, %v498, %v497
    %501 = vmatprep.subr.mxu0 0.0
    %502 = vmatpush1.msra.mxu0 %v462
    %503 = vmatprep.subr.mxu0 0.0
    %504 = vmatpush1.msra.mxu0 %v463
    %505 = vmatprep.subr.mxu0 0.0
    %506 = vmatpush1.msra.mxu0 %v464
    %507 = vmatprep.subr.mxu0 0.0
    %508 = vmatpush1.msra.mxu0 %v465
    %509 = vmatprep.subr.mxu0 0.0
    %510 = vmatpush1.msra.mxu0 %v466
    %511 = vmatprep.subr.mxu0 0.0
    %512 = vmatpush1.msra.mxu0 %v467
    %513 = vmatprep.subr.mxu0 0.0
    %514 = vmatpush1.msra.mxu0 %v468
    %515 = vmatprep.subr.mxu0 0.0
    %516 = vmatpush1.msra.mxu0 %v469
    %517 = vmatprep.subr.mxu0 0.0
    %518 = vmatpush1.msra.mxu0 %v470
    %519 = vmatprep.subr.mxu0 0.0
    %520 = vmatpush1.msra.mxu0 %v471
    %521 = vmatprep.subr.mxu0 0.0
    %522 = vmatpush1.msra.mxu0 %v472
    %523 = vmatprep.subr.mxu0 0.0
    %524 = vmatpush1.msra.mxu0 %v473
    %525 = vmatprep.subr.mxu0 0.0
    %526 = vmatpush1.msra.mxu0 %v474
    %527 = vmatprep.subr.mxu0 0.0
    %528 = vmatpush1.msra.mxu0 %v475
    %529 = vmatprep.subr.mxu0 0.0
    %530 = vmatpush1.msra.mxu0 %v476
    %531 = vmatprep.subr.mxu0 0.0
    %532 = vmatpush1.msra.mxu0 %v477
    %533 = vmatprep.subr.mxu0 0.0
    %534 = vmatpush1.msra.mxu0 0.0
    %535 = vmatprep.subr.mxu0 0.0
    %536 = vmatpush1.msra.mxu0 0.0
    %537 = vmatprep.subr.mxu0 0.0
    %538 = vmatpush1.msra.mxu0 0.0
    %539 = vmatprep.subr.mxu0 0.0
    %540 = vmatpush1.msra.mxu0 0.0
    %541 = vmatprep.subr.mxu0 0.0
    %542 = vmatpush1.msra.mxu0 0.0
    %543 = vmatprep.subr.mxu0 0.0
    %544 = vmatpush1.msra.mxu0 0.0
    %545 = vmatprep.subr.mxu0 0.0
    %546 = vmatpush1.msra.mxu0 0.0
    %547 = vmatprep.subr.mxu0 0.0
    %548 = vmatpush1.msra.mxu0 0.0
    %549 = vmatprep.subr.mxu0 0.0
    %550 = vmatpush1.msra.mxu0 0.0
    %551 = vmatprep.subr.mxu0 0.0
    %552 = vmatpush1.msra.mxu0 0.0
    %553 = vmatprep.subr.mxu0 0.0
    %554 = vmatpush1.msra.mxu0 0.0
    %555 = vmatprep.subr.mxu0 0.0
    %556 = vmatpush1.msra.mxu0 0.0
    %557 = vmatprep.subr.mxu0 0.0
    %558 = vmatpush1.msra.mxu0 0.0
    %559 = vmatprep.subr.mxu0 0.0
    %560 = vmatpush1.msra.mxu0 0.0
    %561 = vmatprep.subr.mxu0 0.0
    %562 = vmatpush1.msra.mxu0 0.0
    %563 = vmatprep.subr.mxu0 0.0
    %564 = vmatpush1.msra.mxu0 0.0
    %565 = vmatprep.mubr.f32.mxu0 0.0
    %566 = vmatmul.mubr.f32.gmra.mrb[0].mxu0 %v499
    %v567 = vpop.f32.mrb[0].mxu0
    %v568 = vadd.f32 0.0, %v567
    %v569 = vpop.f32.mrb[0].mxu0
    %570 = vdwg.mxu0
    %v571 = vadd.f32 %v436, %v568
    %v572 = vld [vmem:[%s2] sm:$0x1]
    %v574 = vlaneseq
    %v575 = vshrl.u32 %v574, 7
    %v576 = vsub.s32 0, %v575
    %v577 = vrot.slane %v572, %v576
    %v579 = vadd.f32 %v571, %v577
    %580 = vst [vmem:[%s3] sm:$0xff] %v579
    // Predicated region
    $region18: #{architecture_forward.1} parent=1 // pred_check
      _
    $region19: #{architecture_forward.1} parent=1 // pred_check_branch
      %582 = sbr.rel (0) target = $region21
    $region20: #{architecture_forward.1} parent=1 // pred_region
      _
    $region21: #{architecture_forward.1} parent=1 // pred_fallthru
      _
    // Predicated region
    $region22: #{architecture_forward.1} parent=1 // pred_check
      _
    $region23: #{architecture_forward.1} parent=1 // pred_check_branch
      %584 = sbr.rel (0) target = $region25
    $region24: #{architecture_forward.1} parent=1 // pred_region
      _
    $region25: #{architecture_forward.1} parent=1 // pred_fallthru
      _
    %585 = vsyncpa [#allocation3], 1

</llo_original>
